<compile_context>
chip_gen: v6e
topology: v6e:2x2x1
jax: 0.10.0
libtpu: 0.0.40
codegen_flags: <defaults>
</compile_context>

<pallas_src>
import jax
import jax.numpy as jnp
from jax.experimental import pallas as pl
from jax.experimental.pallas import tpu as pltpu

INPUT_DIM = 64        # fc1 input width (full array dim -> legal 64-wide block)
HIDDEN_DIM = 256
OUT_DIM = 2           # logical logits width
PAD_OUT = 8           # narrow lane pad for the output projection (16x less store
                      # traffic than a 128-wide f32 pad; block dim == array dim)
TM = 1024             # batch tile: large enough to amortize per-step overhead,
                      # multiple of 16 for bf16 sublane packing, still only a few
                      # MiB of VMEM (safe on v7x's smaller VMEM)


def _round_up(x, m):
    return ((x + m - 1) // m) * m


def mlp_kernel(x_ref, w1_ref, b1_ref, w2_ref, b2_ref, w3_ref, b3_ref, o_ref):
    # x tile: (tm, 64) f32 -> bf16 cast on the VPU (hidden under the DMA).
    x = x_ref[...].astype(jnp.bfloat16)

    # fc1 + relu  (MXU bf16 -> f32 accumulate; relu/add stay f32 on the VPU)
    h1 = jnp.dot(x, w1_ref[...], preferred_element_type=jnp.float32) + b1_ref[...]
    h1 = jnp.maximum(h1, 0.0)

    # fc2 + relu
    h2 = jnp.dot(h1.astype(jnp.bfloat16), w2_ref[...],
                 preferred_element_type=jnp.float32) + b2_ref[...]
    h2 = jnp.maximum(h2, 0.0)

    # residual sum, then out_layer (narrow 8-lane padded output)
    s = (h1 + h2).astype(jnp.bfloat16)
    o_ref[...] = (
        jnp.dot(s, w3_ref[...], preferred_element_type=jnp.float32) + b3_ref[...]
    )


def mlp_forward(x, w1, b1, w2, b2, w3, b3, *, tm=TM):
    """x: (B, 64) f32. Weights in (in, out) layout, f32. Returns (B, 2) f32."""
    B = x.shape[0]

    # Adaptive batch tile: small calls don't pad to a full TM tile.
    tm_eff = min(tm, _round_up(max(B, 1), 16))
    n_tiles = pl.cdiv(B, tm_eff)
    B_pad = n_tiles * tm_eff

    # Only the batch dimension is padded (and only when needed); x stays f32
    # with K=64, so there is no wrapper-side full-buffer pad/cast pass.
    if B_pad != B:
        xp = jnp.zeros((B_pad, INPUT_DIM), x.dtype).at[:B].set(x)
    else:
        xp = x

    # One-time weight casts / narrow output padding (zero columns are inert).
    w1b = w1.astype(jnp.bfloat16)
    w2b = w2.astype(jnp.bfloat16)
    w3p = (
        jnp.zeros((HIDDEN_DIM, PAD_OUT), jnp.bfloat16)
        .at[:, :OUT_DIM]
        .set(w3.astype(jnp.bfloat16))
    )
    b3p = jnp.zeros((1, PAD_OUT), jnp.float32).at[:, :OUT_DIM].set(b3)

    # Weights/biases VMEM-resident: constant index_map -> fetched once.
    resident = lambda shape: pl.BlockSpec(shape, lambda i: (0,) * len(shape))

    out = pl.pallas_call(
        mlp_kernel,
        out_shape=jax.ShapeDtypeStruct((B_pad, PAD_OUT), jnp.float32),
        grid=(n_tiles,),
        in_specs=[
            pl.BlockSpec((tm_eff, INPUT_DIM), lambda i: (i, 0)),  # x streams over batch
            resident((INPUT_DIM, HIDDEN_DIM)),                    # w1
            resident((1, HIDDEN_DIM)),                            # b1
            resident((HIDDEN_DIM, HIDDEN_DIM)),                   # w2
            resident((1, HIDDEN_DIM)),                            # b2
            resident((HIDDEN_DIM, PAD_OUT)),                      # w3 (8-lane pad)
            resident((1, PAD_OUT)),                               # b3
        ],
        out_specs=pl.BlockSpec((tm_eff, PAD_OUT), lambda i: (i, 0)),
        compiler_params=pltpu.CompilerParams(
            dimension_semantics=("parallel",),                    # megacore split on v7x
        ),
    )(xp, w1b, b1, w2b, b2, w3p, b3p)

    return out[:B, :OUT_DIM]


def init_params(key):
    """Deterministic init matching nn.Linear shapes (weights pre-transposed)."""
    k1, k2, k3, k4, k5, k6 = jax.random.split(key, 6)

    def linear(kw, kb, fan_in, fan_out):
        bound = 1.0 / jnp.sqrt(fan_in)
        # torch stores (out, in); we store transposed (in, out) for x @ W.
        w = jax.random.uniform(kw, (fan_in, fan_out), jnp.float32, -bound, bound)
        b = jax.random.uniform(kb, (1, fan_out), jnp.float32, -bound, bound)
        return w, b

    w1, b1 = linear(k1, k2, INPUT_DIM, HIDDEN_DIM)
    w2, b2 = linear(k3, k4, HIDDEN_DIM, HIDDEN_DIM)
    w3, b3 = linear(k5, k6, HIDDEN_DIM, OUT_DIM)
    return w1, b1, w2, b2, w3, b3


def reference_forward_f32(x, w1, b1, w2, b2, w3, b3):
    h1 = jnp.maximum(x @ w1 + b1, 0.0)
    h2 = jnp.maximum(h1 @ w2 + b2, 0.0)
    return (h1 + h2) @ w3 + b3


def reference_forward_bf16(x, w1, b1, w2, b2, w3, b3):
    """Same bf16-input / f32-accumulate recipe as the kernel, for a tight check."""
    xb = x.astype(jnp.bfloat16)
    h1 = jnp.dot(xb, w1.astype(jnp.bfloat16),
                 preferred_element_type=jnp.float32) + b1
    h1 = jnp.maximum(h1, 0.0)
    h2 = jnp.dot(h1.astype(jnp.bfloat16), w2.astype(jnp.bfloat16),
                 preferred_element_type=jnp.float32) + b2
    h2 = jnp.maximum(h2, 0.0)
    s = (h1 + h2).astype(jnp.bfloat16)
    return jnp.dot(s, w3.astype(jnp.bfloat16),
                   preferred_element_type=jnp.float32) + b3


if __name__ == "__main__":
    key = jax.random.PRNGKey(0)
    kx, kp, kx2 = jax.random.split(key, 3)

    params = init_params(kp)

    # Small test batch (adaptive tile -> padded only to 16 rows, single tile).
    B = 8
    x = jax.random.normal(kx, (B, INPUT_DIM), jnp.float32)
    logits = mlp_forward(x, *params)
    jax.block_until_ready(logits)
    assert logits.shape == (B, OUT_DIM)

    ref_bf16 = reference_forward_bf16(x, *params)
    assert jnp.allclose(logits, ref_bf16, atol=2e-2, rtol=2e-2)
    ref_f32 = reference_forward_f32(x, *params)
    assert jnp.allclose(logits, ref_f32, atol=5e-2, rtol=5e-2)

    # Larger, non-multiple batch exercises the multi-tile grid + batch padding.
    B2 = 2050
    x2 = jax.random.normal(kx2, (B2, INPUT_DIM), jnp.float32)
    logits2 = mlp_forward(x2, *params)
    jax.block_until_ready(logits2)
    assert logits2.shape == (B2, OUT_DIM)
    ref2 = reference_forward_bf16(x2, *params)
    assert jnp.allclose(logits2, ref2, atol=2e-2, rtol=2e-2)

    print("KERNEL_OK")
</pallas_src>

<mosaic_0001>
module attributes {stable_mosaic.version = 11 : i64} {
  func.func @mlp_kernel(%arg0: i32, %arg1: memref<16x64xf32, #tpu.memory_space<vmem>>, %arg2: memref<64x256xbf16, #tpu.memory_space<vmem>>, %arg3: memref<1x256xf32, #tpu.memory_space<vmem>>, %arg4: memref<256x256xbf16, #tpu.memory_space<vmem>>, %arg5: memref<1x256xf32, #tpu.memory_space<vmem>>, %arg6: memref<256x8xbf16, #tpu.memory_space<vmem>>, %arg7: memref<1x8xf32, #tpu.memory_space<vmem>>, %arg8: memref<16x8xf32, #tpu.memory_space<vmem>>) attributes {dimension_semantics = [#tpu.dimension_semantics<parallel>], iteration_bounds = array<i64: 1>, scalar_prefetch = 0 : i64, scratch_operands = 0 : i64, tpu.core_type = #tpu.core_type<tc>, window_params = [{transform_indices = @transform_0, window_bounds = array<i64: 16, 64>}, {pipeline_mode = #tpu.pipeline_mode<synchronous>, transform_indices = @transform_1, window_bounds = array<i64: 64, 256>}, {pipeline_mode = #tpu.pipeline_mode<synchronous>, transform_indices = @transform_2, window_bounds = array<i64: 1, 256>}, {pipeline_mode = #tpu.pipeline_mode<synchronous>, transform_indices = @transform_3, window_bounds = array<i64: 256, 256>}, {pipeline_mode = #tpu.pipeline_mode<synchronous>, transform_indices = @transform_4, window_bounds = array<i64: 1, 256>}, {pipeline_mode = #tpu.pipeline_mode<synchronous>, transform_indices = @transform_5, window_bounds = array<i64: 256, 8>}, {pipeline_mode = #tpu.pipeline_mode<synchronous>, transform_indices = @transform_6, window_bounds = array<i64: 1, 8>}, {transform_indices = @transform_7, window_bounds = array<i64: 16, 8>}]} {
    %c0 = arith.constant 0 : index
    %c0_0 = arith.constant 0 : index
    %0 = vector.load %arg1[%c0, %c0_0] : memref<16x64xf32, #tpu.memory_space<vmem>>, vector<16x64xf32>
    %1 = arith.truncf %0 : vector<16x64xf32> to vector<16x64xbf16>
    %c0_1 = arith.constant 0 : index
    %c0_2 = arith.constant 0 : index
    %2 = vector.load %arg2[%c0_1, %c0_2] : memref<64x256xbf16, #tpu.memory_space<vmem>>, vector<64x256xbf16>
    %cst = arith.constant dense<0.000000e+00> : vector<16x256xf32>
    %3 = tpu.matmul %1, %2, %cst {dimension_numbers = #tpu.dot_dimension_numbers<[1], [0], [0], [1], [0, 0, 1, 1], [], []>} : vector<16x64xbf16>, vector<64x256xbf16>, vector<16x256xf32> -> vector<16x256xf32>
    %c0_3 = arith.constant 0 : index
    %c0_4 = arith.constant 0 : index
    %4 = vector.load %arg3[%c0_3, %c0_4] : memref<1x256xf32, #tpu.memory_space<vmem>>, vector<1x256xf32>
    %5 = vector.broadcast %4 : vector<1x256xf32> to vector<16x256xf32>
    %6 = arith.addf %3, %5 : vector<16x256xf32>
    %cst_5 = arith.constant 0.000000e+00 : f32
    %7 = vector.broadcast %cst_5 : f32 to vector<16x256xf32>
    %8 = arith.maximumf %6, %7 : vector<16x256xf32>
    %9 = arith.truncf %8 : vector<16x256xf32> to vector<16x256xbf16>
    %c0_6 = arith.constant 0 : index
    %c0_7 = arith.constant 0 : index
    %10 = vector.load %arg4[%c0_6, %c0_7] : memref<256x256xbf16, #tpu.memory_space<vmem>>, vector<256x256xbf16>
    %cst_8 = arith.constant dense<0.000000e+00> : vector<16x256xf32>
    %11 = tpu.matmul %9, %10, %cst_8 {dimension_numbers = #tpu.dot_dimension_numbers<[1], [0], [0], [1], [0, 0, 1, 1], [], []>} : vector<16x256xbf16>, vector<256x256xbf16>, vector<16x256xf32> -> vector<16x256xf32>
    %c0_9 = arith.constant 0 : index
    %c0_10 = arith.constant 0 : index
    %12 = vector.load %arg5[%c0_9, %c0_10] : memref<1x256xf32, #tpu.memory_space<vmem>>, vector<1x256xf32>
    %13 = vector.broadcast %12 : vector<1x256xf32> to vector<16x256xf32>
    %14 = arith.addf %11, %13 : vector<16x256xf32>
    %cst_11 = arith.constant 0.000000e+00 : f32
    %15 = vector.broadcast %cst_11 : f32 to vector<16x256xf32>
    %16 = arith.maximumf %14, %15 : vector<16x256xf32>
    %17 = arith.addf %8, %16 : vector<16x256xf32>
    %18 = arith.truncf %17 : vector<16x256xf32> to vector<16x256xbf16>
    %c0_12 = arith.constant 0 : index
    %c0_13 = arith.constant 0 : index
    %19 = vector.load %arg6[%c0_12, %c0_13] : memref<256x8xbf16, #tpu.memory_space<vmem>>, vector<256x8xbf16>
    %cst_14 = arith.constant dense<0.000000e+00> : vector<16x8xf32>
    %20 = tpu.matmul %18, %19, %cst_14 {dimension_numbers = #tpu.dot_dimension_numbers<[1], [0], [0], [1], [0, 0, 1, 1], [], []>} : vector<16x256xbf16>, vector<256x8xbf16>, vector<16x8xf32> -> vector<16x8xf32>
    %c0_15 = arith.constant 0 : index
    %c0_16 = arith.constant 0 : index
    %21 = vector.load %arg7[%c0_15, %c0_16] : memref<1x8xf32, #tpu.memory_space<vmem>>, vector<1x8xf32>
    %22 = vector.broadcast %21 : vector<1x8xf32> to vector<16x8xf32>
    %23 = arith.addf %20, %22 : vector<16x8xf32>
    %c0_17 = arith.constant 0 : index
    %c0_18 = arith.constant 0 : index
    %24 = vector.load %arg8[%c0_17, %c0_18] : memref<16x8xf32, #tpu.memory_space<vmem>>, vector<16x8xf32>
    tpu.vector_store %arg8[%c0_17, %c0_18], %23 {strides = array<i32>} : memref<16x8xf32, #tpu.memory_space<vmem>>, vector<16x8xf32>,
    return
  }
  func.func @transform_0(%arg0: i32) -> (i32, i32) {
    %c0_i32 = arith.constant 0 : i32
    %c0_i32_0 = arith.constant 0 : i32
    return %arg0, %c0_i32 : i32, i32
  }
  func.func @transform_1(%arg0: i32) -> (i32, i32) {
    %c0_i32 = arith.constant 0 : i32
    %c0_i32_0 = arith.constant 0 : i32
    %c0_i32_1 = arith.constant 0 : i32
    return %c0_i32, %c0_i32_0 : i32, i32
  }
  func.func @transform_2(%arg0: i32) -> (i32, i32) {
    %c0_i32 = arith.constant 0 : i32
    %c0_i32_0 = arith.constant 0 : i32
    %c0_i32_1 = arith.constant 0 : i32
    return %c0_i32, %c0_i32_0 : i32, i32
  }
  func.func @transform_3(%arg0: i32) -> (i32, i32) {
    %c0_i32 = arith.constant 0 : i32
    %c0_i32_0 = arith.constant 0 : i32
    %c0_i32_1 = arith.constant 0 : i32
    return %c0_i32, %c0_i32_0 : i32, i32
  }
  func.func @transform_4(%arg0: i32) -> (i32, i32) {
    %c0_i32 = arith.constant 0 : i32
    %c0_i32_0 = arith.constant 0 : i32
    %c0_i32_1 = arith.constant 0 : i32
    return %c0_i32, %c0_i32_0 : i32, i32
  }
  func.func @transform_5(%arg0: i32) -> (i32, i32) {
    %c0_i32 = arith.constant 0 : i32
    %c0_i32_0 = arith.constant 0 : i32
    %c0_i32_1 = arith.constant 0 : i32
    return %c0_i32, %c0_i32_0 : i32, i32
  }
  func.func @transform_6(%arg0: i32) -> (i32, i32) {
    %c0_i32 = arith.constant 0 : i32
    %c0_i32_0 = arith.constant 0 : i32
    %c0_i32_1 = arith.constant 0 : i32
    return %c0_i32, %c0_i32_0 : i32, i32
  }
  func.func @transform_7(%arg0: i32) -> (i32, i32) {
    %c0_i32 = arith.constant 0 : i32
    %c0_i32_0 = arith.constant 0 : i32
    return %arg0, %c0_i32 : i32, i32
  }
}

</mosaic_0001>

<llo_original>
// kernel: tpu_custom_call.1
$region0: #{tpu_custom_call.1}
  #allocation0 [shape = 'u32[]', space=smem, size = 0x4, offset = 0x4, fixed_abs, tag = 'smem constant byte address 0x4 - core index']
  #allocation1 [shape = 'u32[144,128]{1,0:T(1,128)}', space=vmem, size = 0x12000, scoped, tag = 'internal scratch']
  %s0 = inlined_call_operand.vmem [shape: f32[16,64], index: 0, kind: input, shape index: {}]
  %s1 = inlined_call_operand.vmem [shape: bf16[64,256], index: 1, kind: input, shape index: {}]
  %s2 = inlined_call_operand.vmem [shape: f32[1,256], index: 2, kind: input, shape index: {}]
  %s3 = inlined_call_operand.hbm [shape: bf16[256,256], index: 3, kind: input, shape index: {}]
  %s4 = inlined_call_operand.vmem [shape: f32[1,256], index: 4, kind: input, shape index: {}]
  %s5 = inlined_call_operand.vmem [shape: bf16[256,8], index: 5, kind: input, shape index: {}]
  %s6 = inlined_call_operand.vmem [shape: f32[1,8], index: 6, kind: input, shape index: {}]
  %s7 = inlined_call_operand.vmem [shape: f32[16,8], index: 7, kind: output, shape index: {}]
  %s8 = sld [smem:[#allocation0]]
  $region42: #{tpu_custom_call.1} parent=0
    _
  %s10 = ssub.s32 1, %s8
  %s11 = scalar_select 0, %s10, %s8
  $region1: #{tpu_custom_call.1} parent=0
    #allocation2 [shape = 'u8[131072]{0}', space=vmem, size = 0x20000, scoped, tag = 'input window, operand 3, single buffered']
    #allocation3 [shape = 's32[1]{0}', space=sflag, size = 0x4, scoped, tag = 'scoped memory for tpu_custom_call.1']
    %12 = vsyncpa [#allocation3], 0
    // Predicated region
    $region2: #{tpu_custom_call.1} parent=1 // pred_check
      _
    $region3: #{tpu_custom_call.1} parent=1 // pred_check_branch
      %14 = sbr.rel (0) target = $region5
    $region4: #{tpu_custom_call.1} parent=1 // pred_region
      _
    $region5: #{tpu_custom_call.1} parent=1 // pred_fallthru
      _
    // Predicated region
    $region6: #{tpu_custom_call.1} parent=1 // pred_check
      _
    $region7: #{tpu_custom_call.1} parent=1 // pred_check_branch
      %16 = sbr.rel (0) target = $region9
    $region8: #{tpu_custom_call.1} parent=1 // pred_region
      _
    $region9: #{tpu_custom_call.1} parent=1 // pred_fallthru
      _
    // Predicated region
    $region10: #{tpu_custom_call.1} parent=1 // pred_check
      _
    $region11: #{tpu_custom_call.1} parent=1 // pred_check_branch
      %18 = sbr.rel (0) target = $region13
    $region12: #{tpu_custom_call.1} parent=1 // pred_region
      _
    $region13: #{tpu_custom_call.1} parent=1 // pred_fallthru
      _
    // Predicated region
    $region14: #{tpu_custom_call.1} parent=1 // pred_check
      _
    $region15: #{tpu_custom_call.1} parent=1 // pred_check_branch
      %20 = sbr.rel (0) target = $region17
    $region16: #{tpu_custom_call.1} parent=1 // pred_region
      %s22 = ssub.s32 4096, 4096
      %23 = vsyncadd [#allocation3], %s22
      %s24 = sshll.u32 [#allocation2], 4
      %s25 = int_to_ptr.vmem [resolvable:$true] %s24
      %30 = dma.hbm_to_vmem [thread:$0]  %s3, 4096, %s25, [#allocation3], 128, 128, 8
    $region17: #{tpu_custom_call.1} parent=1 // pred_fallthru
      _
    // Predicated region
    $region18: #{tpu_custom_call.1} parent=1 // pred_check
      _
    $region19: #{tpu_custom_call.1} parent=1 // pred_check_branch
      %32 = sbr.rel (0) target = $region21
    $region20: #{tpu_custom_call.1} parent=1 // pred_region
      _
    $region21: #{tpu_custom_call.1} parent=1 // pred_fallthru
      _
    // Predicated region
    $region22: #{tpu_custom_call.1} parent=1 // pred_check
      _
    $region23: #{tpu_custom_call.1} parent=1 // pred_check_branch
      %34 = sbr.rel (0) target = $region25
    $region24: #{tpu_custom_call.1} parent=1 // pred_region
      _
    $region25: #{tpu_custom_call.1} parent=1 // pred_fallthru
      _
    // Predicated region
    $region26: #{tpu_custom_call.1} parent=1 // pred_check
      _
    $region27: #{tpu_custom_call.1} parent=1 // pred_check_branch
      %36 = sbr.rel (0) target = $region29
    $region28: #{tpu_custom_call.1} parent=1 // pred_region
      _
    $region29: #{tpu_custom_call.1} parent=1 // pred_fallthru
      _
    // Predicated region
    $region30: #{tpu_custom_call.1} parent=1 // pred_check
      _
    $region31: #{tpu_custom_call.1} parent=1 // pred_check_branch
      %38 = sbr.rel (0) target = $region33
    $region32: #{tpu_custom_call.1} parent=1 // pred_region
      %39 = dma.done [#allocation3], 4096
    $region33: #{tpu_custom_call.1} parent=1 // pred_fallthru
      _
    %v41 = vld [vmem:[%s0] sm:$0xff]
    %v42 = vld [vmem:[%s0 + $0x8] sm:$0xff]
    %v43 = vpack.c.bf16 %v42, %v41
    %v44 = vld [vmem:[%s1] sm:$0xff]
    %v45 = vld [vmem:[%s1 + $0x8] sm:$0xff]
    %v46 = vld [vmem:[%s1 + $0x10] sm:$0xff]
    %v47 = vld [vmem:[%s1 + $0x18] sm:$0xff]
    %v48 = vld [vmem:[%s1 + $0x20] sm:$0xff]
    %v49 = vld [vmem:[%s1 + $0x28] sm:$0xff]
    %v50 = vld [vmem:[%s1 + $0x30] sm:$0xff]
    %v51 = vld [vmem:[%s1 + $0x38] sm:$0xff]
    %v52 = vld [vmem:[%s2] sm:$0x3]
    %v54 = vlaneseq
    %v55 = vshrl.u32 %v54, 7
    %v56 = vsub.s32 0, %v55
    %v57 = vrot.slane %v52, %v56
    %v58 = vlaneseq
    %v59 = vshrl.u32 %v58, 7
    %v60 = vsub.s32 1, %v59
    %v61 = vrot.slane %v52, %v60
    %v72 = vunpack.c.l.b16 %v44
    %v73 = vunpack.c.h.b16 %v44
    %v74 = vunpack.c.l.b16 %v45
    %v75 = vunpack.c.h.b16 %v45
    %v76 = vunpack.c.l.b16 %v46
    %v77 = vunpack.c.h.b16 %v46
    %v78 = vunpack.c.l.b16 %v47
    %v79 = vunpack.c.h.b16 %v47
    %v80 = vunpack.c.l.b16 %v48
    %v81 = vunpack.c.h.b16 %v48
    %v82 = vunpack.c.l.b16 %v49
    %v83 = vunpack.c.h.b16 %v49
    %v84 = vunpack.c.l.b16 %v50
    %v85 = vunpack.c.h.b16 %v50
    %v86 = vunpack.c.l.b16 %v51
    %v87 = vunpack.c.h.b16 %v51
    %v88 = vpack.c.b16 %v74, %v72
    %v89 = vpack.c.b16 %v75, %v73
    %v90 = vpack.c.b16 %v78, %v76
    %v91 = vpack.c.b16 %v79, %v77
    %v92 = vpack.c.b16 %v82, %v80
    %v93 = vpack.c.b16 %v83, %v81
    %v94 = vpack.c.b16 %v86, %v84
    %v95 = vpack.c.b16 %v87, %v85
    %vm104 = vcmask 523264
    %v106 = vsel %vm104, %v43, 0
    %108 = vmatprep.subr.bf16.mxu0 0
    %109 = vmatpush1.bf16.msra.mxu0 0
    %110 = vmatprep.subr.bf16.mxu0 0
    %111 = vmatpush1.bf16.msra.mxu0 0
    %112 = vmatprep.subr.bf16.mxu0 0
    %113 = vmatpush1.bf16.msra.mxu0 0
    %114 = vmatprep.subr.bf16.mxu0 0
    %115 = vmatpush1.bf16.msra.mxu0 0
    %116 = vmatprep.subr.bf16.mxu0 %v95
    %117 = vmatpush1.bf16.msra.mxu0 %v94
    %118 = vmatprep.subr.bf16.mxu0 %v93
    %119 = vmatpush1.bf16.msra.mxu0 %v92
    %120 = vmatprep.subr.bf16.mxu0 %v91
    %121 = vmatpush1.bf16.msra.mxu0 %v90
    %122 = vmatprep.subr.bf16.mxu0 %v89
    %123 = vmatpush1.bf16.msra.mxu0 %v88
    %124 = vmatprep.subr.bf16.mxu0 0
    %125 = vmatpush2.bf16.msra.mxu0 0
    %126 = vmatprep.subr.bf16.mxu0 0
    %127 = vmatpush2.bf16.msra.mxu0 0
    %128 = vmatprep.subr.bf16.mxu0 0
    %129 = vmatpush2.bf16.msra.mxu0 0
    %130 = vmatprep.subr.bf16.mxu0 0
    %131 = vmatpush2.bf16.msra.mxu0 0
    %132 = vmatprep.subr.bf16.mxu0 0
    %133 = vmatpush2.bf16.msra.mxu0 0
    %134 = vmatprep.subr.bf16.mxu0 0
    %135 = vmatpush2.bf16.msra.mxu0 0
    %136 = vmatprep.subr.bf16.mxu0 0
    %137 = vmatpush2.bf16.msra.mxu0 0
    %138 = vmatprep.subr.bf16.mxu0 0
    %139 = vmatpush2.bf16.msra.mxu0 0
    %140 = vmatprep.mubr.bf16.mxu0 0
    %141 = vmatmul.mubr.bf16.gmra.mxu0 %v106
    %v142 = vpop.f32.mrf.mxu0
    %v143 = vadd.f32 %v57, %v142
    %v144 = vpop.f32.mrf.mxu0
    %v145 = vadd.f32 %v61, %v144
    %v146 = vpop.f32.mrf.mxu0
    %v147 = vadd.f32 %v57, %v146
    %v148 = vpop.f32.mrf.mxu0
    %v149 = vadd.f32 %v61, %v148
    %150 = vdwg.mxu0
    %v151 = vmax.f32 %v143, 0.0
    %v152 = vmax.f32 %v145, 0.0
    %v153 = vmax.f32 %v147, 0.0
    %v154 = vmax.f32 %v149, 0.0
    %v155 = vpack.c.bf16 %v153, %v151
    %v156 = vpack.c.bf16 %v154, %v152
    %v157 = vld [vmem:[#allocation2] sm:$0xff]
    %v158 = vld [vmem:[#allocation2 + $0x8] sm:$0xff]
    %v159 = vld [vmem:[#allocation2 + $0x10] sm:$0xff]
    %v160 = vld [vmem:[#allocation2 + $0x18] sm:$0xff]
    %v161 = vld [vmem:[#allocation2 + $0x20] sm:$0xff]
    %v162 = vld [vmem:[#allocation2 + $0x28] sm:$0xff]
    %v163 = vld [vmem:[#allocation2 + $0x30] sm:$0xff]
    %v164 = vld [vmem:[#allocation2 + $0x38] sm:$0xff]
    %v165 = vld [vmem:[#allocation2 + $0x40] sm:$0xff]
    %v166 = vld [vmem:[#allocation2 + $0x48] sm:$0xff]
    %v167 = vld [vmem:[#allocation2 + $0x50] sm:$0xff]
    %v168 = vld [vmem:[#allocation2 + $0x58] sm:$0xff]
    %v169 = vld [vmem:[#allocation2 + $0x60] sm:$0xff]
    %v170 = vld [vmem:[#allocation2 + $0x68] sm:$0xff]
    %v171 = vld [vmem:[#allocation2 + $0x70] sm:$0xff]
    %v172 = vld [vmem:[#allocation2 + $0x78] sm:$0xff]
    %v173 = vld [vmem:[#allocation2 + $0x80] sm:$0xff]
    %v174 = vld [vmem:[#allocation2 + $0x88] sm:$0xff]
    %v175 = vld [vmem:[#allocation2 + $0x90] sm:$0xff]
    %v176 = vld [vmem:[#allocation2 + $0x98] sm:$0xff]
    %v177 = vld [vmem:[#allocation2 + $0xa0] sm:$0xff]
    %v178 = vld [vmem:[#allocation2 + $0xa8] sm:$0xff]
    %v179 = vld [vmem:[#allocation2 + $0xb0] sm:$0xff]
    %v180 = vld [vmem:[#allocation2 + $0xb8] sm:$0xff]
    %v181 = vld [vmem:[#allocation2 + $0xc0] sm:$0xff]
    %v182 = vld [vmem:[#allocation2 + $0xc8] sm:$0xff]
    %v183 = vld [vmem:[#allocation2 + $0xd0] sm:$0xff]
    %v184 = vld [vmem:[#allocation2 + $0xd8] sm:$0xff]
    %v185 = vld [vmem:[#allocation2 + $0xe0] sm:$0xff]
    %v186 = vld [vmem:[#allocation2 + $0xe8] sm:$0xff]
    %v187 = vld [vmem:[#allocation2 + $0xf0] sm:$0xff]
    %v188 = vld [vmem:[#allocation2 + $0xf8] sm:$0xff]
    %v189 = vld [vmem:[%s4] sm:$0x3]
    %v191 = vlaneseq
    %v192 = vshrl.u32 %v191, 7
    %v193 = vsub.s32 0, %v192
    %v194 = vrot.slane %v189, %v193
    %v195 = vlaneseq
    %v196 = vshrl.u32 %v195, 7
    %v197 = vsub.s32 1, %v196
    %v198 = vrot.slane %v189, %v197
    %v233 = vunpack.c.l.b16 %v157
    %v234 = vunpack.c.h.b16 %v157
    %v235 = vunpack.c.l.b16 %v158
    %v236 = vunpack.c.h.b16 %v158
    %v237 = vunpack.c.l.b16 %v159
    %v238 = vunpack.c.h.b16 %v159
    %v239 = vunpack.c.l.b16 %v160
    %v240 = vunpack.c.h.b16 %v160
    %v241 = vunpack.c.l.b16 %v161
    %v242 = vunpack.c.h.b16 %v161
    %v243 = vunpack.c.l.b16 %v162
    %v244 = vunpack.c.h.b16 %v162
    %v245 = vunpack.c.l.b16 %v163
    %v246 = vunpack.c.h.b16 %v163
    %v247 = vunpack.c.l.b16 %v164
    %v248 = vunpack.c.h.b16 %v164
    %v249 = vunpack.c.l.b16 %v165
    %v250 = vunpack.c.h.b16 %v165
    %v251 = vunpack.c.l.b16 %v166
    %v252 = vunpack.c.h.b16 %v166
    %v253 = vunpack.c.l.b16 %v167
    %v254 = vunpack.c.h.b16 %v167
    %v255 = vunpack.c.l.b16 %v168
    %v256 = vunpack.c.h.b16 %v168
    %v257 = vunpack.c.l.b16 %v169
    %v258 = vunpack.c.h.b16 %v169
    %v259 = vunpack.c.l.b16 %v170
    %v260 = vunpack.c.h.b16 %v170
    %v261 = vunpack.c.l.b16 %v171
    %v262 = vunpack.c.h.b16 %v171
    %v263 = vunpack.c.l.b16 %v172
    %v264 = vunpack.c.h.b16 %v172
    %v265 = vunpack.c.l.b16 %v173
    %v266 = vunpack.c.h.b16 %v173
    %v267 = vunpack.c.l.b16 %v174
    %v268 = vunpack.c.h.b16 %v174
    %v269 = vunpack.c.l.b16 %v175
    %v270 = vunpack.c.h.b16 %v175
    %v271 = vunpack.c.l.b16 %v176
    %v272 = vunpack.c.h.b16 %v176
    %v273 = vunpack.c.l.b16 %v177
    %v274 = vunpack.c.h.b16 %v177
    %v275 = vunpack.c.l.b16 %v178
    %v276 = vunpack.c.h.b16 %v178
    %v277 = vunpack.c.l.b16 %v179
    %v278 = vunpack.c.h.b16 %v179
    %v279 = vunpack.c.l.b16 %v180
    %v280 = vunpack.c.h.b16 %v180
    %v281 = vunpack.c.l.b16 %v181
    %v282 = vunpack.c.h.b16 %v181
    %v283 = vunpack.c.l.b16 %v182
    %v284 = vunpack.c.h.b16 %v182
    %v285 = vunpack.c.l.b16 %v183
    %v286 = vunpack.c.h.b16 %v183
    %v287 = vunpack.c.l.b16 %v184
    %v288 = vunpack.c.h.b16 %v184
    %v289 = vunpack.c.l.b16 %v185
    %v290 = vunpack.c.h.b16 %v185
    %v291 = vunpack.c.l.b16 %v186
    %v292 = vunpack.c.h.b16 %v186
    %v293 = vunpack.c.l.b16 %v187
    %v294 = vunpack.c.h.b16 %v187
    %v295 = vunpack.c.l.b16 %v188
    %v296 = vunpack.c.h.b16 %v188
    %v297 = vpack.c.b16 %v235, %v233
    %v298 = vpack.c.b16 %v236, %v234
    %v299 = vpack.c.b16 %v239, %v237
    %v300 = vpack.c.b16 %v240, %v238
    %v301 = vpack.c.b16 %v243, %v241
    %v302 = vpack.c.b16 %v244, %v242
    %v303 = vpack.c.b16 %v247, %v245
    %v304 = vpack.c.b16 %v248, %v246
    %v305 = vpack.c.b16 %v251, %v249
    %v306 = vpack.c.b16 %v252, %v250
    %v307 = vpack.c.b16 %v255, %v253
    %v308 = vpack.c.b16 %v256, %v254
    %v309 = vpack.c.b16 %v259, %v257
    %v310 = vpack.c.b16 %v260, %v258
    %v311 = vpack.c.b16 %v263, %v261
    %v312 = vpack.c.b16 %v264, %v262
    %v313 = vpack.c.b16 %v267, %v265
    %v314 = vpack.c.b16 %v268, %v266
    %v315 = vpack.c.b16 %v271, %v269
    %v316 = vpack.c.b16 %v272, %v270
    %v317 = vpack.c.b16 %v275, %v273
    %v318 = vpack.c.b16 %v276, %v274
    %v319 = vpack.c.b16 %v279, %v277
    %v320 = vpack.c.b16 %v280, %v278
    %v321 = vpack.c.b16 %v283, %v281
    %v322 = vpack.c.b16 %v284, %v282
    %v323 = vpack.c.b16 %v287, %v285
    %v324 = vpack.c.b16 %v288, %v286
    %v325 = vpack.c.b16 %v291, %v289
    %v326 = vpack.c.b16 %v292, %v290
    %v327 = vpack.c.b16 %v295, %v293
    %v328 = vpack.c.b16 %v296, %v294
    %361 = vmatprep.subr.bf16.mxu0 %v312
    %362 = vmatpush1.bf16.msra.mxu0 %v311
    %363 = vmatprep.subr.bf16.mxu0 %v310
    %364 = vmatpush1.bf16.msra.mxu0 %v309
    %365 = vmatprep.subr.bf16.mxu0 %v308
    %366 = vmatpush1.bf16.msra.mxu0 %v307
    %367 = vmatprep.subr.bf16.mxu0 %v306
    %368 = vmatpush1.bf16.msra.mxu0 %v305
    %369 = vmatprep.subr.bf16.mxu0 %v304
    %370 = vmatpush1.bf16.msra.mxu0 %v303
    %371 = vmatprep.subr.bf16.mxu0 %v302
    %372 = vmatpush1.bf16.msra.mxu0 %v301
    %373 = vmatprep.subr.bf16.mxu0 %v300
    %374 = vmatpush1.bf16.msra.mxu0 %v299
    %375 = vmatprep.subr.bf16.mxu0 %v298
    %376 = vmatpush1.bf16.msra.mxu0 %v297
    %377 = vmatprep.subr.bf16.mxu0 %v328
    %378 = vmatpush2.bf16.msra.mxu0 %v327
    %379 = vmatprep.subr.bf16.mxu0 %v326
    %380 = vmatpush2.bf16.msra.mxu0 %v325
    %381 = vmatprep.subr.bf16.mxu0 %v324
    %382 = vmatpush2.bf16.msra.mxu0 %v323
    %383 = vmatprep.subr.bf16.mxu0 %v322
    %384 = vmatpush2.bf16.msra.mxu0 %v321
    %385 = vmatprep.subr.bf16.mxu0 %v320
    %386 = vmatpush2.bf16.msra.mxu0 %v319
    %387 = vmatprep.subr.bf16.mxu0 %v318
    %388 = vmatpush2.bf16.msra.mxu0 %v317
    %389 = vmatprep.subr.bf16.mxu0 %v316
    %390 = vmatpush2.bf16.msra.mxu0 %v315
    %391 = vmatprep.subr.bf16.mxu0 %v314
    %392 = vmatpush2.bf16.msra.mxu0 %v313
    %393 = vmatprep.mubr.bf16.mxu0 %v156
    %394 = vmatmul.mubr.bf16.gmra.mxu0 %v155
    %v395 = vpop.f32.mrf.mxu0
    %v396 = vadd.f32 %v194, %v395
    %v397 = vpop.f32.mrf.mxu0
    %v398 = vadd.f32 %v198, %v397
    %v399 = vpop.f32.mrf.mxu0
    %v400 = vadd.f32 %v194, %v399
    %v401 = vpop.f32.mrf.mxu0
    %v402 = vadd.f32 %v198, %v401
    %403 = vdwg.mxu0
    %v404 = vmax.f32 %v396, 0.0
    %v405 = vmax.f32 %v398, 0.0
    %v406 = vmax.f32 %v400, 0.0
    %v407 = vmax.f32 %v402, 0.0
    %v408 = vadd.f32 %v151, %v404
    %v409 = vadd.f32 %v152, %v405
    %v410 = vadd.f32 %v153, %v406
    %v411 = vadd.f32 %v154, %v407
    %v412 = vpack.c.bf16 %v410, %v408
    %v413 = vpack.c.bf16 %v411, %v409
    %v414 = vld [vmem:[%s5] sm:$0xf]
    %v415 = vld [vmem:[%s5 + $0x4] sm:$0xf]
    %v416 = vld [vmem:[%s5 + $0x8] sm:$0xf]
    %v417 = vld [vmem:[%s5 + $0xc] sm:$0xf]
    %v418 = vld [vmem:[%s5 + $0x10] sm:$0xf]
    %v419 = vld [vmem:[%s5 + $0x14] sm:$0xf]
    %v420 = vld [vmem:[%s5 + $0x18] sm:$0xf]
    %v421 = vld [vmem:[%s5 + $0x1c] sm:$0xf]
    %v422 = vld [vmem:[%s5 + $0x20] sm:$0xf]
    %v423 = vld [vmem:[%s5 + $0x24] sm:$0xf]
    %v424 = vld [vmem:[%s5 + $0x28] sm:$0xf]
    %v425 = vld [vmem:[%s5 + $0x2c] sm:$0xf]
    %v426 = vld [vmem:[%s5 + $0x30] sm:$0xf]
    %v427 = vld [vmem:[%s5 + $0x34] sm:$0xf]
    %v428 = vld [vmem:[%s5 + $0x38] sm:$0xf]
    %v429 = vld [vmem:[%s5 + $0x3c] sm:$0xf]
    %v430 = vld [vmem:[%s5 + $0x40] sm:$0xf]
    %v431 = vld [vmem:[%s5 + $0x44] sm:$0xf]
    %v432 = vld [vmem:[%s5 + $0x48] sm:$0xf]
    %v433 = vld [vmem:[%s5 + $0x4c] sm:$0xf]
    %v434 = vld [vmem:[%s5 + $0x50] sm:$0xf]
    %v435 = vld [vmem:[%s5 + $0x54] sm:$0xf]
    %v436 = vld [vmem:[%s5 + $0x58] sm:$0xf]
    %v437 = vld [vmem:[%s5 + $0x5c] sm:$0xf]
    %v438 = vld [vmem:[%s5 + $0x60] sm:$0xf]
    %v439 = vld [vmem:[%s5 + $0x64] sm:$0xf]
    %v440 = vld [vmem:[%s5 + $0x68] sm:$0xf]
    %v441 = vld [vmem:[%s5 + $0x6c] sm:$0xf]
    %v442 = vld [vmem:[%s5 + $0x70] sm:$0xf]
    %v443 = vld [vmem:[%s5 + $0x74] sm:$0xf]
    %v444 = vld [vmem:[%s5 + $0x78] sm:$0xf]
    %v445 = vld [vmem:[%s5 + $0x7c] sm:$0xf]
    %v446 = vld [vmem:[%s6] sm:$0x1]
    %v448 = vlaneseq
    %v449 = vshrl.u32 %v448, 7
    %v450 = vsub.s32 0, %v449
    %v451 = vrot.slane %v446, %v450
    %v485 = vunpack.c.l.b16 %v414
    %v486 = vunpack.c.l.b16 %v415
    %v487 = vunpack.c.l.b16 %v416
    %v488 = vunpack.c.l.b16 %v417
    %v489 = vunpack.c.l.b16 %v418
    %v490 = vunpack.c.l.b16 %v419
    %v491 = vunpack.c.l.b16 %v420
    %v492 = vunpack.c.l.b16 %v421
    %v493 = vunpack.c.l.b16 %v422
    %v494 = vunpack.c.l.b16 %v423
    %v495 = vunpack.c.l.b16 %v424
    %v496 = vunpack.c.l.b16 %v425
    %v497 = vunpack.c.l.b16 %v426
    %v498 = vunpack.c.l.b16 %v427
    %v499 = vunpack.c.l.b16 %v428
    %v500 = vunpack.c.l.b16 %v429
    %v501 = vunpack.c.l.b16 %v430
    %v502 = vunpack.c.l.b16 %v431
    %v503 = vunpack.c.l.b16 %v432
    %v504 = vunpack.c.l.b16 %v433
    %v505 = vunpack.c.l.b16 %v434
    %v506 = vunpack.c.l.b16 %v435
    %v507 = vunpack.c.l.b16 %v436
    %v508 = vunpack.c.l.b16 %v437
    %v509 = vunpack.c.l.b16 %v438
    %v510 = vunpack.c.l.b16 %v439
    %v511 = vunpack.c.l.b16 %v440
    %v512 = vunpack.c.l.b16 %v441
    %v513 = vunpack.c.l.b16 %v442
    %v514 = vunpack.c.l.b16 %v443
    %v515 = vunpack.c.l.b16 %v444
    %v516 = vunpack.c.l.b16 %v445
    %v517 = vpack.c.b16 %v486, %v485
    %v518 = vpack.c.b16 %v488, %v487
    %v519 = vpack.c.b16 %v490, %v489
    %v520 = vpack.c.b16 %v492, %v491
    %v521 = vpack.c.b16 %v494, %v493
    %v522 = vpack.c.b16 %v496, %v495
    %v523 = vpack.c.b16 %v498, %v497
    %v524 = vpack.c.b16 %v500, %v499
    %v525 = vpack.c.b16 %v502, %v501
    %v526 = vpack.c.b16 %v504, %v503
    %v527 = vpack.c.b16 %v506, %v505
    %v528 = vpack.c.b16 %v508, %v507
    %v529 = vpack.c.b16 %v510, %v509
    %v530 = vpack.c.b16 %v512, %v511
    %v531 = vpack.c.b16 %v514, %v513
    %v532 = vpack.c.b16 %v516, %v515
    %549 = vmatprep.subr.bf16.mxu0 0
    %550 = vmatpush1.bf16.msra.mxu0 %v524
    %551 = vmatprep.subr.bf16.mxu0 0
    %552 = vmatpush1.bf16.msra.mxu0 %v523
    %553 = vmatprep.subr.bf16.mxu0 0
    %554 = vmatpush1.bf16.msra.mxu0 %v522
    %555 = vmatprep.subr.bf16.mxu0 0
    %556 = vmatpush1.bf16.msra.mxu0 %v521
    %557 = vmatprep.subr.bf16.mxu0 0
    %558 = vmatpush1.bf16.msra.mxu0 %v520
    %559 = vmatprep.subr.bf16.mxu0 0
    %560 = vmatpush1.bf16.msra.mxu0 %v519
    %561 = vmatprep.subr.bf16.mxu0 0
    %562 = vmatpush1.bf16.msra.mxu0 %v518
    %563 = vmatprep.subr.bf16.mxu0 0
    %564 = vmatpush1.bf16.msra.mxu0 %v517
    %565 = vmatprep.subr.bf16.mxu0 0
    %566 = vmatpush2.bf16.msra.mxu0 %v532
    %567 = vmatprep.subr.bf16.mxu0 0
    %568 = vmatpush2.bf16.msra.mxu0 %v531
    %569 = vmatprep.subr.bf16.mxu0 0
    %570 = vmatpush2.bf16.msra.mxu0 %v530
    %571 = vmatprep.subr.bf16.mxu0 0
    %572 = vmatpush2.bf16.msra.mxu0 %v529
    %573 = vmatprep.subr.bf16.mxu0 0
    %574 = vmatpush2.bf16.msra.mxu0 %v528
    %575 = vmatprep.subr.bf16.mxu0 0
    %576 = vmatpush2.bf16.msra.mxu0 %v527
    %577 = vmatprep.subr.bf16.mxu0 0
    %578 = vmatpush2.bf16.msra.mxu0 %v526
    %579 = vmatprep.subr.bf16.mxu0 0
    %580 = vmatpush2.bf16.msra.mxu0 %v525
    %581 = vmatprep.mubr.bf16.mxu0 %v413
    %582 = vmatmul.mubr.bf16.gmra.mxu0 %v412
    %v583 = vpop.f32.mrf.mxu0
    %v584 = vadd.f32 %v451, %v583
    %v585 = vpop.f32.mrf.mxu0
    %v586 = vpop.f32.mrf.mxu0
    %v587 = vadd.f32 %v451, %v586
    %v588 = vpop.f32.mrf.mxu0
    %589 = vdwg.mxu0
    %vm590 = vcmask 64512
    %591 = vst.msk [vmem:[%s7] sm:$0xff] %vm590, %v584
    %592 = vst.msk [vmem:[%s7 + $0x8] sm:$0xff] %vm590, %v587
    // Predicated region
    $region34: #{tpu_custom_call.1} parent=1 // pred_check
      _
    $region35: #{tpu_custom_call.1} parent=1 // pred_check_branch
      %594 = sbr.rel (0) target = $region37
    $region36: #{tpu_custom_call.1} parent=1 // pred_region
      _
    $region37: #{tpu_custom_call.1} parent=1 // pred_fallthru
      _
    // Predicated region
    $region38: #{tpu_custom_call.1} parent=1 // pred_check
      _
    $region39: #{tpu_custom_call.1} parent=1 // pred_check_branch
      %596 = sbr.rel (0) target = $region41
    $region40: #{tpu_custom_call.1} parent=1 // pred_region
      _
    $region41: #{tpu_custom_call.1} parent=1 // pred_fallthru
      _
    %597 = vsyncpa [#allocation3], 1

</llo_original>
